<compile_context>
chip_gen: v7x
topology: tpu7x:2x2x1
jax: 0.10.0
libtpu: 0.0.40
codegen_flags: <defaults>
</compile_context>

<pallas_src>
import functools

import jax
import jax.numpy as jnp
from jax.experimental import pallas as pl
from jax.experimental.pallas import tpu as pltpu

N_IN = 4
HIDDEN = 128
N_OUT = 2
N_OUT_PAD = 128  # lane-dense padded output width


def qnet_kernel(x_ref, w1_ref, b1_ref, w2_ref, b2_ref, w3_ref, b3_ref, o_ref):
    # fc1 + ReLU : (TB,4) @ (4,128) done as 4 VPU broadcast FMAs (f32).
    x = x_ref[...]                        # (TB, 4)  f32
    w1 = w1_ref[...]                      # (4, 128) f32
    h1 = b1_ref[...] + x[:, 0:1] * w1[0:1, :]
    for k in range(1, N_IN):              # unrolled at trace time
        h1 = h1 + x[:, k:k + 1] * w1[k:k + 1, :]
    h1 = jnp.maximum(h1, 0.0)

    # fc2 + ReLU : bf16 MXU matmul, f32 accumulation, f32 elementwise.
    h2 = jnp.dot(h1.astype(jnp.bfloat16), w2_ref[...],
                 preferred_element_type=jnp.float32)
    h2 = jnp.maximum(h2 + b2_ref[...], 0.0)

    # fc3 (padded to 128 lanes) : bf16 MXU matmul, f32 accumulation.
    out = jnp.dot(h2.astype(jnp.bfloat16), w3_ref[...],
                  preferred_element_type=jnp.float32)
    o_ref[...] = (out + b3_ref[...]).astype(o_ref.dtype)


@functools.partial(jax.jit, static_argnames=("tb",))
def qnet_forward(x, kernel_params, tb=128):
    """x: (B, 4) f32; kernel_params from prepare_params(). Returns (B, 2) f32."""
    w1, b1, w2, b2, w3p, b3p = kernel_params
    B = x.shape[0]
    bp = ((B + tb - 1) // tb) * tb
    if bp != B:
        x = jnp.pad(x, ((0, bp - B), (0, 0)))
    grid = (bp // tb,)

    flops = 2 * bp * (N_IN * HIDDEN + HIDDEN * HIDDEN + HIDDEN * N_OUT_PAD)
    bytes_accessed = (
        bp * (N_IN * 4 + N_OUT_PAD * 4)          # x in, padded out
        + w1.size * 4 + b1.size * 4
        + w2.size * 2 + b2.size * 4
        + w3p.size * 2 + b3p.size * 4
    )

    out = pl.pallas_call(
        qnet_kernel,
        out_shape=jax.ShapeDtypeStruct((bp, N_OUT_PAD), jnp.float32),
        grid_spec=pltpu.PrefetchScalarGridSpec(
            num_scalar_prefetch=0,
            grid=grid,
            in_specs=[
                pl.BlockSpec((tb, N_IN), lambda i: (i, 0)),           # x tile
                pl.BlockSpec((N_IN, HIDDEN), lambda i: (0, 0)),       # w1 (resident)
                pl.BlockSpec((1, HIDDEN), lambda i: (0, 0)),          # b1
                pl.BlockSpec((HIDDEN, HIDDEN), lambda i: (0, 0)),     # w2 (bf16)
                pl.BlockSpec((1, HIDDEN), lambda i: (0, 0)),          # b2
                pl.BlockSpec((HIDDEN, N_OUT_PAD), lambda i: (0, 0)),  # w3 padded (bf16)
                pl.BlockSpec((1, N_OUT_PAD), lambda i: (0, 0)),       # b3 padded
            ],
            out_specs=pl.BlockSpec((tb, N_OUT_PAD), lambda i: (i, 0)),
        ),
        compiler_params=pltpu.CompilerParams(
            dimension_semantics=("parallel",),          # megacore on v7x
            vmem_limit_bytes=32 * 1024 * 1024,          # safe on v7x's 64 MiB VMEM
        ),
        cost_estimate=pl.CostEstimate(
            flops=flops, transcendentals=0, bytes_accessed=bytes_accessed),
    )(x, w1, b1, w2, b2, w3p, b3p)

    return out[:B, :N_OUT]


def init_params(key):
    """PyTorch nn.Linear-style init: U(-1/sqrt(fan_in), 1/sqrt(fan_in)); weights
    stored as (in, out) so forward is x @ W + b (== x @ W_pt.T + b)."""
    def linear(k, fan_in, fan_out):
        kw, kb = jax.random.split(k)
        bound = 1.0 / jnp.sqrt(float(fan_in))
        w = jax.random.uniform(kw, (fan_in, fan_out), jnp.float32, -bound, bound)
        b = jax.random.uniform(kb, (1, fan_out), jnp.float32, -bound, bound)
        return w, b

    k1, k2, k3 = jax.random.split(key, 3)
    w1, b1 = linear(k1, N_IN, HIDDEN)
    w2, b2 = linear(k2, HIDDEN, HIDDEN)
    w3, b3 = linear(k3, HIDDEN, N_OUT)
    return (w1, b1, w2, b2, w3, b3)


def prepare_params(raw_params):
    """Kernel-ready params: fc1 stays f32 (VPU path); fc2/fc3 weights cast to
    bf16 for the MXU; fc3 weight/bias zero-padded to 128 output lanes."""
    w1, b1, w2, b2, w3, b3 = raw_params
    w3p = jnp.zeros((HIDDEN, N_OUT_PAD), jnp.float32).at[:, :N_OUT].set(w3)
    b3p = jnp.zeros((1, N_OUT_PAD), jnp.float32).at[:, :N_OUT].set(b3)
    return (
        w1.astype(jnp.float32),
        b1.astype(jnp.float32),
        w2.astype(jnp.bfloat16),
        b2.astype(jnp.float32),
        w3p.astype(jnp.bfloat16),
        b3p.astype(jnp.float32),
    )


def qnet_reference(x, raw_params):
    """Pure f32 reference matching the PyTorch module semantics."""
    w1, b1, w2, b2, w3, b3 = raw_params
    h1 = jnp.maximum(x @ w1 + b1, 0.0)
    h2 = jnp.maximum(h1 @ w2 + b2, 0.0)
    return h2 @ w3 + b3


if __name__ == "__main__":
    key = jax.random.PRNGKey(0)
    kp, kx1, kx2 = jax.random.split(key, 3)

    raw_params = init_params(kp)
    kernel_params = prepare_params(raw_params)

    # Small "acting" batch (CartPole obs has 4 features).
    x_small = jax.random.normal(kx1, (8, N_IN), jnp.float32)
    out_small = jax.block_until_ready(qnet_forward(x_small, kernel_params))
    ref_small = qnet_reference(x_small, raw_params)
    assert out_small.shape == (8, N_OUT)
    assert jnp.allclose(out_small, ref_small, atol=3e-2, rtol=3e-2), (
        float(jnp.max(jnp.abs(out_small - ref_small))))

    # Larger, non-tile-aligned batch: exercises batch padding + multi-step grid.
    x_big = jax.random.normal(kx2, (300, N_IN), jnp.float32)
    out_big = jax.block_until_ready(qnet_forward(x_big, kernel_params))
    ref_big = qnet_reference(x_big, raw_params)
    assert out_big.shape == (300, N_OUT)
    assert jnp.allclose(out_big, ref_big, atol=3e-2, rtol=3e-2), (
        float(jnp.max(jnp.abs(out_big - ref_big))))

    print("KERNEL_OK")
</pallas_src>

<mosaic_0001>
module attributes {stable_mosaic.version = 11 : i64} {
  func.func @qnet_kernel(%arg0: i32, %arg1: memref<128x4xf32, #tpu.memory_space<vmem>>, %arg2: memref<4x128xf32, #tpu.memory_space<vmem>>, %arg3: memref<1x128xf32, #tpu.memory_space<vmem>>, %arg4: memref<128x128xbf16, #tpu.memory_space<vmem>>, %arg5: memref<1x128xf32, #tpu.memory_space<vmem>>, %arg6: memref<128x128xbf16, #tpu.memory_space<vmem>>, %arg7: memref<1x128xf32, #tpu.memory_space<vmem>>, %arg8: memref<128x128xf32, #tpu.memory_space<vmem>>) attributes {dimension_semantics = [#tpu.dimension_semantics<parallel>], iteration_bounds = array<i64: 1>, scalar_prefetch = 0 : i64, scratch_operands = 0 : i64, tpu.core_type = #tpu.core_type<tc>, window_params = [{transform_indices = @transform_0, window_bounds = array<i64: 128, 4>}, {pipeline_mode = #tpu.pipeline_mode<synchronous>, transform_indices = @transform_1, window_bounds = array<i64: 4, 128>}, {pipeline_mode = #tpu.pipeline_mode<synchronous>, transform_indices = @transform_2, window_bounds = array<i64: 1, 128>}, {pipeline_mode = #tpu.pipeline_mode<synchronous>, transform_indices = @transform_3, window_bounds = array<i64: 128, 128>}, {pipeline_mode = #tpu.pipeline_mode<synchronous>, transform_indices = @transform_4, window_bounds = array<i64: 1, 128>}, {pipeline_mode = #tpu.pipeline_mode<synchronous>, transform_indices = @transform_5, window_bounds = array<i64: 128, 128>}, {pipeline_mode = #tpu.pipeline_mode<synchronous>, transform_indices = @transform_6, window_bounds = array<i64: 1, 128>}, {transform_indices = @transform_7, window_bounds = array<i64: 128, 128>}]} {
    %c0 = arith.constant 0 : index
    %c0_0 = arith.constant 0 : index
    %0 = vector.load %arg1[%c0, %c0_0] : memref<128x4xf32, #tpu.memory_space<vmem>>, vector<128x4xf32>
    %c0_1 = arith.constant 0 : index
    %c0_2 = arith.constant 0 : index
    %1 = vector.load %arg2[%c0_1, %c0_2] : memref<4x128xf32, #tpu.memory_space<vmem>>, vector<4x128xf32>
    %c0_3 = arith.constant 0 : index
    %c0_4 = arith.constant 0 : index
    %2 = vector.load %arg3[%c0_3, %c0_4] : memref<1x128xf32, #tpu.memory_space<vmem>>, vector<1x128xf32>
    %3 = vector.extract_strided_slice %0 {offsets = [0, 0], sizes = [128, 1], strides = [1, 1]} : vector<128x4xf32> to vector<128x1xf32>
    %4 = vector.extract_strided_slice %1 {offsets = [0, 0], sizes = [1, 128], strides = [1, 1]} : vector<4x128xf32> to vector<1x128xf32>
    %5 = vector.broadcast %3 : vector<128x1xf32> to vector<128x128xf32>
    %6 = vector.broadcast %4 : vector<1x128xf32> to vector<128x128xf32>
    %7 = arith.mulf %5, %6 : vector<128x128xf32>
    %8 = vector.broadcast %2 : vector<1x128xf32> to vector<128x128xf32>
    %9 = arith.addf %8, %7 : vector<128x128xf32>
    %10 = vector.extract_strided_slice %0 {offsets = [0, 1], sizes = [128, 1], strides = [1, 1]} : vector<128x4xf32> to vector<128x1xf32>
    %11 = vector.extract_strided_slice %1 {offsets = [1, 0], sizes = [1, 128], strides = [1, 1]} : vector<4x128xf32> to vector<1x128xf32>
    %12 = vector.broadcast %10 : vector<128x1xf32> to vector<128x128xf32>
    %13 = vector.broadcast %11 : vector<1x128xf32> to vector<128x128xf32>
    %14 = arith.mulf %12, %13 : vector<128x128xf32>
    %15 = arith.addf %9, %14 : vector<128x128xf32>
    %16 = vector.extract_strided_slice %0 {offsets = [0, 2], sizes = [128, 1], strides = [1, 1]} : vector<128x4xf32> to vector<128x1xf32>
    %17 = vector.extract_strided_slice %1 {offsets = [2, 0], sizes = [1, 128], strides = [1, 1]} : vector<4x128xf32> to vector<1x128xf32>
    %18 = vector.broadcast %16 : vector<128x1xf32> to vector<128x128xf32>
    %19 = vector.broadcast %17 : vector<1x128xf32> to vector<128x128xf32>
    %20 = arith.mulf %18, %19 : vector<128x128xf32>
    %21 = arith.addf %15, %20 : vector<128x128xf32>
    %22 = vector.extract_strided_slice %0 {offsets = [0, 3], sizes = [128, 1], strides = [1, 1]} : vector<128x4xf32> to vector<128x1xf32>
    %23 = vector.extract_strided_slice %1 {offsets = [3, 0], sizes = [1, 128], strides = [1, 1]} : vector<4x128xf32> to vector<1x128xf32>
    %24 = vector.broadcast %22 : vector<128x1xf32> to vector<128x128xf32>
    %25 = vector.broadcast %23 : vector<1x128xf32> to vector<128x128xf32>
    %26 = arith.mulf %24, %25 : vector<128x128xf32>
    %27 = arith.addf %21, %26 : vector<128x128xf32>
    %cst = arith.constant 0.000000e+00 : f32
    %28 = vector.broadcast %cst : f32 to vector<128x128xf32>
    %29 = arith.maximumf %27, %28 : vector<128x128xf32>
    %30 = arith.truncf %29 : vector<128x128xf32> to vector<128x128xbf16>
    %c0_5 = arith.constant 0 : index
    %c0_6 = arith.constant 0 : index
    %31 = vector.load %arg4[%c0_5, %c0_6] : memref<128x128xbf16, #tpu.memory_space<vmem>>, vector<128x128xbf16>
    %cst_7 = arith.constant dense<0.000000e+00> : vector<128x128xf32>
    %32 = tpu.matmul %30, %31, %cst_7 {dimension_numbers = #tpu.dot_dimension_numbers<[1], [0], [0], [1], [0, 0, 1, 1], [], []>} : vector<128x128xbf16>, vector<128x128xbf16>, vector<128x128xf32> -> vector<128x128xf32>
    %c0_8 = arith.constant 0 : index
    %c0_9 = arith.constant 0 : index
    %33 = vector.load %arg5[%c0_8, %c0_9] : memref<1x128xf32, #tpu.memory_space<vmem>>, vector<1x128xf32>
    %34 = vector.broadcast %33 : vector<1x128xf32> to vector<128x128xf32>
    %35 = arith.addf %32, %34 : vector<128x128xf32>
    %cst_10 = arith.constant 0.000000e+00 : f32
    %36 = vector.broadcast %cst_10 : f32 to vector<128x128xf32>
    %37 = arith.maximumf %35, %36 : vector<128x128xf32>
    %38 = arith.truncf %37 : vector<128x128xf32> to vector<128x128xbf16>
    %c0_11 = arith.constant 0 : index
    %c0_12 = arith.constant 0 : index
    %39 = vector.load %arg6[%c0_11, %c0_12] : memref<128x128xbf16, #tpu.memory_space<vmem>>, vector<128x128xbf16>
    %cst_13 = arith.constant dense<0.000000e+00> : vector<128x128xf32>
    %40 = tpu.matmul %38, %39, %cst_13 {dimension_numbers = #tpu.dot_dimension_numbers<[1], [0], [0], [1], [0, 0, 1, 1], [], []>} : vector<128x128xbf16>, vector<128x128xbf16>, vector<128x128xf32> -> vector<128x128xf32>
    %c0_14 = arith.constant 0 : index
    %c0_15 = arith.constant 0 : index
    %41 = vector.load %arg7[%c0_14, %c0_15] : memref<1x128xf32, #tpu.memory_space<vmem>>, vector<1x128xf32>
    %42 = vector.broadcast %41 : vector<1x128xf32> to vector<128x128xf32>
    %43 = arith.addf %40, %42 : vector<128x128xf32>
    %c0_16 = arith.constant 0 : index
    %c0_17 = arith.constant 0 : index
    %44 = vector.load %arg8[%c0_16, %c0_17] : memref<128x128xf32, #tpu.memory_space<vmem>>, vector<128x128xf32>
    tpu.vector_store %arg8[%c0_16, %c0_17], %43 {strides = array<i32>} : memref<128x128xf32, #tpu.memory_space<vmem>>, vector<128x128xf32>,
    return
  }
  func.func @transform_0(%arg0: i32) -> (i32, i32) {
    %c0_i32 = arith.constant 0 : i32
    %c0_i32_0 = arith.constant 0 : i32
    return %arg0, %c0_i32 : i32, i32
  }
  func.func @transform_1(%arg0: i32) -> (i32, i32) {
    %c0_i32 = arith.constant 0 : i32
    %c0_i32_0 = arith.constant 0 : i32
    %c0_i32_1 = arith.constant 0 : i32
    return %c0_i32, %c0_i32_0 : i32, i32
  }
  func.func @transform_2(%arg0: i32) -> (i32, i32) {
    %c0_i32 = arith.constant 0 : i32
    %c0_i32_0 = arith.constant 0 : i32
    %c0_i32_1 = arith.constant 0 : i32
    return %c0_i32, %c0_i32_0 : i32, i32
  }
  func.func @transform_3(%arg0: i32) -> (i32, i32) {
    %c0_i32 = arith.constant 0 : i32
    %c0_i32_0 = arith.constant 0 : i32
    %c0_i32_1 = arith.constant 0 : i32
    return %c0_i32, %c0_i32_0 : i32, i32
  }
  func.func @transform_4(%arg0: i32) -> (i32, i32) {
    %c0_i32 = arith.constant 0 : i32
    %c0_i32_0 = arith.constant 0 : i32
    %c0_i32_1 = arith.constant 0 : i32
    return %c0_i32, %c0_i32_0 : i32, i32
  }
  func.func @transform_5(%arg0: i32) -> (i32, i32) {
    %c0_i32 = arith.constant 0 : i32
    %c0_i32_0 = arith.constant 0 : i32
    %c0_i32_1 = arith.constant 0 : i32
    return %c0_i32, %c0_i32_0 : i32, i32
  }
  func.func @transform_6(%arg0: i32) -> (i32, i32) {
    %c0_i32 = arith.constant 0 : i32
    %c0_i32_0 = arith.constant 0 : i32
    %c0_i32_1 = arith.constant 0 : i32
    return %c0_i32, %c0_i32_0 : i32, i32
  }
  func.func @transform_7(%arg0: i32) -> (i32, i32) {
    %c0_i32 = arith.constant 0 : i32
    %c0_i32_0 = arith.constant 0 : i32
    return %arg0, %c0_i32 : i32, i32
  }
}

</mosaic_0001>

<llo_original>
// kernel: qnet_forward.1
$region0: #{qnet_forward.1}
  #allocation0 [shape = 'u32[]', space=smem, size = 0x4, offset = 0x4, fixed_abs, tag = 'smem constant byte address 0x4 - core index']
  #allocation1 [shape = 'u32[144,128]{1,0:T(1,128)}', space=vmem, size = 0x12000, scoped, tag = 'internal scratch']
  %s0 = inlined_call_operand.vmem [shape: f32[128,4], index: 0, kind: input, shape index: {}]
  %s1 = inlined_call_operand.vmem [shape: f32[4,128], index: 1, kind: input, shape index: {}]
  %s2 = inlined_call_operand.vmem [shape: f32[1,128], index: 2, kind: input, shape index: {}]
  %s3 = inlined_call_operand.vmem [shape: bf16[128,128], index: 3, kind: input, shape index: {}]
  %s4 = inlined_call_operand.vmem [shape: f32[1,128], index: 4, kind: input, shape index: {}]
  %s5 = inlined_call_operand.vmem [shape: bf16[128,128], index: 5, kind: input, shape index: {}]
  %s6 = inlined_call_operand.vmem [shape: f32[1,128], index: 6, kind: input, shape index: {}]
  %s7 = inlined_call_operand.vmem [shape: f32[128,128], index: 7, kind: output, shape index: {}]
  %s8 = sld [smem:[#allocation0]]
  $region38: #{qnet_forward.1} parent=0
    _
  %s10 = ssub.s32 1, %s8
  %s11 = scalar_select 0, %s10, %s8
  // Predicated region
  $region2: #{qnet_forward.1} parent=0 // pred_check
    _
  $region3: #{qnet_forward.1} parent=0 // pred_check_branch
    %13 = sbr.rel (0) target = $region5
  $region4: #{qnet_forward.1} parent=0 // pred_region
    _
  $region5: #{qnet_forward.1} parent=0 // pred_fallthru
    _
  // Predicated region
  $region6: #{qnet_forward.1} parent=0 // pred_check
    _
  $region7: #{qnet_forward.1} parent=0 // pred_check_branch
    %15 = sbr.rel (0) target = $region9
  $region8: #{qnet_forward.1} parent=0 // pred_region
    _
  $region9: #{qnet_forward.1} parent=0 // pred_fallthru
    _
  // Predicated region
  $region10: #{qnet_forward.1} parent=0 // pred_check
    _
  $region11: #{qnet_forward.1} parent=0 // pred_check_branch
    %17 = sbr.rel (0) target = $region13
  $region12: #{qnet_forward.1} parent=0 // pred_region
    _
  $region13: #{qnet_forward.1} parent=0 // pred_fallthru
    _
  // Predicated region
  $region14: #{qnet_forward.1} parent=0 // pred_check
    _
  $region15: #{qnet_forward.1} parent=0 // pred_check_branch
    %19 = sbr.rel (0) target = $region17
  $region16: #{qnet_forward.1} parent=0 // pred_region
    _
  $region17: #{qnet_forward.1} parent=0 // pred_fallthru
    _
  // Predicated region
  $region18: #{qnet_forward.1} parent=0 // pred_check
    _
  $region19: #{qnet_forward.1} parent=0 // pred_check_branch
    %21 = sbr.rel (0) target = $region21
  $region20: #{qnet_forward.1} parent=0 // pred_region
    _
  $region21: #{qnet_forward.1} parent=0 // pred_fallthru
    _
  // Predicated region
  $region22: #{qnet_forward.1} parent=0 // pred_check
    _
  $region23: #{qnet_forward.1} parent=0 // pred_check_branch
    %23 = sbr.rel (0) target = $region25
  $region24: #{qnet_forward.1} parent=0 // pred_region
    _
  $region25: #{qnet_forward.1} parent=0 // pred_fallthru
    _
  // Predicated region
  $region26: #{qnet_forward.1} parent=0 // pred_check
    _
  $region27: #{qnet_forward.1} parent=0 // pred_check_branch
    %25 = sbr.rel (0) target = $region29
  $region28: #{qnet_forward.1} parent=0 // pred_region
    _
  $region29: #{qnet_forward.1} parent=0 // pred_fallthru
    _
  %v27 = vld [vmem:[%s0] sm:$0xff]
  %v28 = vld [vmem:[%s0 + $0x8] sm:$0xff]
  %v29 = vld [vmem:[%s0 + $0x10] sm:$0xff]
  %v30 = vld [vmem:[%s0 + $0x18] sm:$0xff]
  %v31 = vld [vmem:[%s0 + $0x20] sm:$0xff]
  %v32 = vld [vmem:[%s0 + $0x28] sm:$0xff]
  %v33 = vld [vmem:[%s0 + $0x30] sm:$0xff]
  %v34 = vld [vmem:[%s0 + $0x38] sm:$0xff]
  %v35 = vld [vmem:[%s0 + $0x40] sm:$0xff]
  %v36 = vld [vmem:[%s0 + $0x48] sm:$0xff]
  %v37 = vld [vmem:[%s0 + $0x50] sm:$0xff]
  %v38 = vld [vmem:[%s0 + $0x58] sm:$0xff]
  %v39 = vld [vmem:[%s0 + $0x60] sm:$0xff]
  %v40 = vld [vmem:[%s0 + $0x68] sm:$0xff]
  %v41 = vld [vmem:[%s0 + $0x70] sm:$0xff]
  %v42 = vld [vmem:[%s0 + $0x78] sm:$0xff]
  %v43 = vld [vmem:[%s1] sm:$0xf]
  %v44 = vld [vmem:[%s2] sm:$0x1]
  %46 = vset.pattern.permute.xlu0 0
  %47 = vperm.xlu0 %46, %v27
  %v48 = vpop.permute.xlu0 %47
  %51 = vset.pattern.permute.xlu0 0
  %52 = vperm.xlu0 %51, %v28
  %v53 = vpop.permute.xlu0 %52
  %56 = vset.pattern.permute.xlu0 0
  %57 = vperm.xlu0 %56, %v29
  %v58 = vpop.permute.xlu0 %57
  %61 = vset.pattern.permute.xlu0 0
  %62 = vperm.xlu0 %61, %v30
  %v63 = vpop.permute.xlu0 %62
  %66 = vset.pattern.permute.xlu0 0
  %67 = vperm.xlu0 %66, %v31
  %v68 = vpop.permute.xlu0 %67
  %71 = vset.pattern.permute.xlu0 0
  %72 = vperm.xlu0 %71, %v32
  %v73 = vpop.permute.xlu0 %72
  %76 = vset.pattern.permute.xlu0 0
  %77 = vperm.xlu0 %76, %v33
  %v78 = vpop.permute.xlu0 %77
  %81 = vset.pattern.permute.xlu0 0
  %82 = vperm.xlu0 %81, %v34
  %v83 = vpop.permute.xlu0 %82
  %86 = vset.pattern.permute.xlu0 0
  %87 = vperm.xlu0 %86, %v35
  %v88 = vpop.permute.xlu0 %87
  %91 = vset.pattern.permute.xlu0 0
  %92 = vperm.xlu0 %91, %v36
  %v93 = vpop.permute.xlu0 %92
  %96 = vset.pattern.permute.xlu0 0
  %97 = vperm.xlu0 %96, %v37
  %v98 = vpop.permute.xlu0 %97
  %101 = vset.pattern.permute.xlu0 0
  %102 = vperm.xlu0 %101, %v38
  %v103 = vpop.permute.xlu0 %102
  %106 = vset.pattern.permute.xlu0 0
  %107 = vperm.xlu0 %106, %v39
  %v108 = vpop.permute.xlu0 %107
  %111 = vset.pattern.permute.xlu0 0
  %112 = vperm.xlu0 %111, %v40
  %v113 = vpop.permute.xlu0 %112
  %116 = vset.pattern.permute.xlu0 0
  %117 = vperm.xlu0 %116, %v41
  %v118 = vpop.permute.xlu0 %117
  %121 = vset.pattern.permute.xlu0 0
  %122 = vperm.xlu0 %121, %v42
  %v123 = vpop.permute.xlu0 %122
  %v125 = vlaneseq
  %v126 = vshrl.u32 %v125, 7
  %v127 = vsub.s32 0, %v126
  %v128 = vrot.slane %v43, %v127
  %v129 = vmul.f32 %v48, %v128
  %v130 = vmul.f32 %v53, %v128
  %v131 = vmul.f32 %v58, %v128
  %v132 = vmul.f32 %v63, %v128
  %v133 = vmul.f32 %v68, %v128
  %v134 = vmul.f32 %v73, %v128
  %v135 = vmul.f32 %v78, %v128
  %v136 = vmul.f32 %v83, %v128
  %v137 = vmul.f32 %v88, %v128
  %v138 = vmul.f32 %v93, %v128
  %v139 = vmul.f32 %v98, %v128
  %v140 = vmul.f32 %v103, %v128
  %v141 = vmul.f32 %v108, %v128
  %v142 = vmul.f32 %v113, %v128
  %v143 = vmul.f32 %v118, %v128
  %v144 = vmul.f32 %v123, %v128
  %v146 = vlaneseq
  %v147 = vshrl.u32 %v146, 7
  %v148 = vsub.s32 0, %v147
  %v149 = vrot.slane %v44, %v148
  %v151 = vadd.f32 %v149, %v129
  %v152 = vadd.f32 %v149, %v130
  %v153 = vadd.f32 %v149, %v131
  %v154 = vadd.f32 %v149, %v132
  %v155 = vadd.f32 %v149, %v133
  %v156 = vadd.f32 %v149, %v134
  %v157 = vadd.f32 %v149, %v135
  %v158 = vadd.f32 %v149, %v136
  %v159 = vadd.f32 %v149, %v137
  %v160 = vadd.f32 %v149, %v138
  %v161 = vadd.f32 %v149, %v139
  %v162 = vadd.f32 %v149, %v140
  %v163 = vadd.f32 %v149, %v141
  %v164 = vadd.f32 %v149, %v142
  %v165 = vadd.f32 %v149, %v143
  %v166 = vadd.f32 %v149, %v144
  %167 = vset.pattern.permute.xlu0 1
  %168 = vperm.xlu0 %167, %v27
  %v169 = vpop.permute.xlu0 %168
  %171 = vset.pattern.permute.xlu0 1
  %172 = vperm.xlu0 %171, %v28
  %v173 = vpop.permute.xlu0 %172
  %175 = vset.pattern.permute.xlu0 1
  %176 = vperm.xlu0 %175, %v29
  %v177 = vpop.permute.xlu0 %176
  %179 = vset.pattern.permute.xlu0 1
  %180 = vperm.xlu0 %179, %v30
  %v181 = vpop.permute.xlu0 %180
  %183 = vset.pattern.permute.xlu0 1
  %184 = vperm.xlu0 %183, %v31
  %v185 = vpop.permute.xlu0 %184
  %187 = vset.pattern.permute.xlu0 1
  %188 = vperm.xlu0 %187, %v32
  %v189 = vpop.permute.xlu0 %188
  %191 = vset.pattern.permute.xlu0 1
  %192 = vperm.xlu0 %191, %v33
  %v193 = vpop.permute.xlu0 %192
  %195 = vset.pattern.permute.xlu0 1
  %196 = vperm.xlu0 %195, %v34
  %v197 = vpop.permute.xlu0 %196
  %199 = vset.pattern.permute.xlu0 1
  %200 = vperm.xlu0 %199, %v35
  %v201 = vpop.permute.xlu0 %200
  %203 = vset.pattern.permute.xlu0 1
  %204 = vperm.xlu0 %203, %v36
  %v205 = vpop.permute.xlu0 %204
  %207 = vset.pattern.permute.xlu0 1
  %208 = vperm.xlu0 %207, %v37
  %v209 = vpop.permute.xlu0 %208
  %211 = vset.pattern.permute.xlu0 1
  %212 = vperm.xlu0 %211, %v38
  %v213 = vpop.permute.xlu0 %212
  %215 = vset.pattern.permute.xlu0 1
  %216 = vperm.xlu0 %215, %v39
  %v217 = vpop.permute.xlu0 %216
  %219 = vset.pattern.permute.xlu0 1
  %220 = vperm.xlu0 %219, %v40
  %v221 = vpop.permute.xlu0 %220
  %223 = vset.pattern.permute.xlu0 1
  %224 = vperm.xlu0 %223, %v41
  %v225 = vpop.permute.xlu0 %224
  %227 = vset.pattern.permute.xlu0 1
  %228 = vperm.xlu0 %227, %v42
  %v229 = vpop.permute.xlu0 %228
  %v231 = vlaneseq
  %v232 = vshrl.u32 %v231, 7
  %v233 = vsub.s32 1, %v232
  %v234 = vrot.slane %v43, %v233
  %v235 = vmul.f32 %v169, %v234
  %v236 = vmul.f32 %v173, %v234
  %v237 = vmul.f32 %v177, %v234
  %v238 = vmul.f32 %v181, %v234
  %v239 = vmul.f32 %v185, %v234
  %v240 = vmul.f32 %v189, %v234
  %v241 = vmul.f32 %v193, %v234
  %v242 = vmul.f32 %v197, %v234
  %v243 = vmul.f32 %v201, %v234
  %v244 = vmul.f32 %v205, %v234
  %v245 = vmul.f32 %v209, %v234
  %v246 = vmul.f32 %v213, %v234
  %v247 = vmul.f32 %v217, %v234
  %v248 = vmul.f32 %v221, %v234
  %v249 = vmul.f32 %v225, %v234
  %v250 = vmul.f32 %v229, %v234
  %v251 = vadd.f32 %v151, %v235
  %v252 = vadd.f32 %v152, %v236
  %v253 = vadd.f32 %v153, %v237
  %v254 = vadd.f32 %v154, %v238
  %v255 = vadd.f32 %v155, %v239
  %v256 = vadd.f32 %v156, %v240
  %v257 = vadd.f32 %v157, %v241
  %v258 = vadd.f32 %v158, %v242
  %v259 = vadd.f32 %v159, %v243
  %v260 = vadd.f32 %v160, %v244
  %v261 = vadd.f32 %v161, %v245
  %v262 = vadd.f32 %v162, %v246
  %v263 = vadd.f32 %v163, %v247
  %v264 = vadd.f32 %v164, %v248
  %v265 = vadd.f32 %v165, %v249
  %v266 = vadd.f32 %v166, %v250
  %267 = vset.pattern.permute.xlu0 2
  %268 = vperm.xlu0 %267, %v27
  %v269 = vpop.permute.xlu0 %268
  %271 = vset.pattern.permute.xlu0 2
  %272 = vperm.xlu0 %271, %v28
  %v273 = vpop.permute.xlu0 %272
  %275 = vset.pattern.permute.xlu0 2
  %276 = vperm.xlu0 %275, %v29
  %v277 = vpop.permute.xlu0 %276
  %279 = vset.pattern.permute.xlu0 2
  %280 = vperm.xlu0 %279, %v30
  %v281 = vpop.permute.xlu0 %280
  %283 = vset.pattern.permute.xlu0 2
  %284 = vperm.xlu0 %283, %v31
  %v285 = vpop.permute.xlu0 %284
  %287 = vset.pattern.permute.xlu0 2
  %288 = vperm.xlu0 %287, %v32
  %v289 = vpop.permute.xlu0 %288
  %291 = vset.pattern.permute.xlu0 2
  %292 = vperm.xlu0 %291, %v33
  %v293 = vpop.permute.xlu0 %292
  %295 = vset.pattern.permute.xlu0 2
  %296 = vperm.xlu0 %295, %v34
  %v297 = vpop.permute.xlu0 %296
  %299 = vset.pattern.permute.xlu0 2
  %300 = vperm.xlu0 %299, %v35
  %v301 = vpop.permute.xlu0 %300
  %303 = vset.pattern.permute.xlu0 2
  %304 = vperm.xlu0 %303, %v36
  %v305 = vpop.permute.xlu0 %304
  %307 = vset.pattern.permute.xlu0 2
  %308 = vperm.xlu0 %307, %v37
  %v309 = vpop.permute.xlu0 %308
  %311 = vset.pattern.permute.xlu0 2
  %312 = vperm.xlu0 %311, %v38
  %v313 = vpop.permute.xlu0 %312
  %315 = vset.pattern.permute.xlu0 2
  %316 = vperm.xlu0 %315, %v39
  %v317 = vpop.permute.xlu0 %316
  %319 = vset.pattern.permute.xlu0 2
  %320 = vperm.xlu0 %319, %v40
  %v321 = vpop.permute.xlu0 %320
  %323 = vset.pattern.permute.xlu0 2
  %324 = vperm.xlu0 %323, %v41
  %v325 = vpop.permute.xlu0 %324
  %327 = vset.pattern.permute.xlu0 2
  %328 = vperm.xlu0 %327, %v42
  %v329 = vpop.permute.xlu0 %328
  %v331 = vlaneseq
  %v332 = vshrl.u32 %v331, 7
  %v333 = vsub.s32 2, %v332
  %v334 = vrot.slane %v43, %v333
  %v335 = vmul.f32 %v269, %v334
  %v336 = vmul.f32 %v273, %v334
  %v337 = vmul.f32 %v277, %v334
  %v338 = vmul.f32 %v281, %v334
  %v339 = vmul.f32 %v285, %v334
  %v340 = vmul.f32 %v289, %v334
  %v341 = vmul.f32 %v293, %v334
  %v342 = vmul.f32 %v297, %v334
  %v343 = vmul.f32 %v301, %v334
  %v344 = vmul.f32 %v305, %v334
  %v345 = vmul.f32 %v309, %v334
  %v346 = vmul.f32 %v313, %v334
  %v347 = vmul.f32 %v317, %v334
  %v348 = vmul.f32 %v321, %v334
  %v349 = vmul.f32 %v325, %v334
  %v350 = vmul.f32 %v329, %v334
  %v351 = vadd.f32 %v251, %v335
  %v352 = vadd.f32 %v252, %v336
  %v353 = vadd.f32 %v253, %v337
  %v354 = vadd.f32 %v254, %v338
  %v355 = vadd.f32 %v255, %v339
  %v356 = vadd.f32 %v256, %v340
  %v357 = vadd.f32 %v257, %v341
  %v358 = vadd.f32 %v258, %v342
  %v359 = vadd.f32 %v259, %v343
  %v360 = vadd.f32 %v260, %v344
  %v361 = vadd.f32 %v261, %v345
  %v362 = vadd.f32 %v262, %v346
  %v363 = vadd.f32 %v263, %v347
  %v364 = vadd.f32 %v264, %v348
  %v365 = vadd.f32 %v265, %v349
  %v366 = vadd.f32 %v266, %v350
  %367 = vset.pattern.permute.xlu0 3
  %368 = vperm.xlu0 %367, %v27
  %v369 = vpop.permute.xlu0 %368
  %371 = vset.pattern.permute.xlu0 3
  %372 = vperm.xlu0 %371, %v28
  %v373 = vpop.permute.xlu0 %372
  %375 = vset.pattern.permute.xlu0 3
  %376 = vperm.xlu0 %375, %v29
  %v377 = vpop.permute.xlu0 %376
  %379 = vset.pattern.permute.xlu0 3
  %380 = vperm.xlu0 %379, %v30
  %v381 = vpop.permute.xlu0 %380
  %383 = vset.pattern.permute.xlu0 3
  %384 = vperm.xlu0 %383, %v31
  %v385 = vpop.permute.xlu0 %384
  %387 = vset.pattern.permute.xlu0 3
  %388 = vperm.xlu0 %387, %v32
  %v389 = vpop.permute.xlu0 %388
  %391 = vset.pattern.permute.xlu0 3
  %392 = vperm.xlu0 %391, %v33
  %v393 = vpop.permute.xlu0 %392
  %395 = vset.pattern.permute.xlu0 3
  %396 = vperm.xlu0 %395, %v34
  %v397 = vpop.permute.xlu0 %396
  %399 = vset.pattern.permute.xlu0 3
  %400 = vperm.xlu0 %399, %v35
  %v401 = vpop.permute.xlu0 %400
  %403 = vset.pattern.permute.xlu0 3
  %404 = vperm.xlu0 %403, %v36
  %v405 = vpop.permute.xlu0 %404
  %407 = vset.pattern.permute.xlu0 3
  %408 = vperm.xlu0 %407, %v37
  %v409 = vpop.permute.xlu0 %408
  %411 = vset.pattern.permute.xlu0 3
  %412 = vperm.xlu0 %411, %v38
  %v413 = vpop.permute.xlu0 %412
  %415 = vset.pattern.permute.xlu0 3
  %416 = vperm.xlu0 %415, %v39
  %v417 = vpop.permute.xlu0 %416
  %419 = vset.pattern.permute.xlu0 3
  %420 = vperm.xlu0 %419, %v40
  %v421 = vpop.permute.xlu0 %420
  %423 = vset.pattern.permute.xlu0 3
  %424 = vperm.xlu0 %423, %v41
  %v425 = vpop.permute.xlu0 %424
  %427 = vset.pattern.permute.xlu0 3
  %428 = vperm.xlu0 %427, %v42
  %v429 = vpop.permute.xlu0 %428
  %v431 = vlaneseq
  %v432 = vshrl.u32 %v431, 7
  %v433 = vsub.s32 3, %v432
  %v434 = vrot.slane %v43, %v433
  %v435 = vmul.f32 %v369, %v434
  %v436 = vmul.f32 %v373, %v434
  %v437 = vmul.f32 %v377, %v434
  %v438 = vmul.f32 %v381, %v434
  %v439 = vmul.f32 %v385, %v434
  %v440 = vmul.f32 %v389, %v434
  %v441 = vmul.f32 %v393, %v434
  %v442 = vmul.f32 %v397, %v434
  %v443 = vmul.f32 %v401, %v434
  %v444 = vmul.f32 %v405, %v434
  %v445 = vmul.f32 %v409, %v434
  %v446 = vmul.f32 %v413, %v434
  %v447 = vmul.f32 %v417, %v434
  %v448 = vmul.f32 %v421, %v434
  %v449 = vmul.f32 %v425, %v434
  %v450 = vmul.f32 %v429, %v434
  %v451 = vadd.f32 %v351, %v435
  %v452 = vadd.f32 %v352, %v436
  %v453 = vadd.f32 %v353, %v437
  %v454 = vadd.f32 %v354, %v438
  %v455 = vadd.f32 %v355, %v439
  %v456 = vadd.f32 %v356, %v440
  %v457 = vadd.f32 %v357, %v441
  %v458 = vadd.f32 %v358, %v442
  %v459 = vadd.f32 %v359, %v443
  %v460 = vadd.f32 %v360, %v444
  %v461 = vadd.f32 %v361, %v445
  %v462 = vadd.f32 %v362, %v446
  %v463 = vadd.f32 %v363, %v447
  %v464 = vadd.f32 %v364, %v448
  %v465 = vadd.f32 %v365, %v449
  %v466 = vadd.f32 %v366, %v450
  %v467 = vmax.f32 %v451, 0.0
  %v468 = vmax.f32 %v452, 0.0
  %v469 = vmax.f32 %v453, 0.0
  %v470 = vmax.f32 %v454, 0.0
  %v471 = vmax.f32 %v455, 0.0
  %v472 = vmax.f32 %v456, 0.0
  %v473 = vmax.f32 %v457, 0.0
  %v474 = vmax.f32 %v458, 0.0
  %v475 = vmax.f32 %v459, 0.0
  %v476 = vmax.f32 %v460, 0.0
  %v477 = vmax.f32 %v461, 0.0
  %v478 = vmax.f32 %v462, 0.0
  %v479 = vmax.f32 %v463, 0.0
  %v480 = vmax.f32 %v464, 0.0
  %v481 = vmax.f32 %v465, 0.0
  %v482 = vmax.f32 %v466, 0.0
  %v483 = vpack.c.bf16 %v468, %v467
  %v484 = vpack.c.bf16 %v470, %v469
  %v485 = vpack.c.bf16 %v472, %v471
  %v486 = vpack.c.bf16 %v474, %v473
  %v487 = vpack.c.bf16 %v476, %v475
  %v488 = vpack.c.bf16 %v478, %v477
  %v489 = vpack.c.bf16 %v480, %v479
  %v490 = vpack.c.bf16 %v482, %v481
  %v491 = vld [vmem:[%s3] sm:$0xf]
  %v492 = vld [vmem:[%s3 + $0x4] sm:$0xf]
  %v493 = vld [vmem:[%s3 + $0x8] sm:$0xf]
  %v494 = vld [vmem:[%s3 + $0xc] sm:$0xf]
  %v495 = vld [vmem:[%s3 + $0x10] sm:$0xf]
  %v496 = vld [vmem:[%s3 + $0x14] sm:$0xf]
  %v497 = vld [vmem:[%s3 + $0x18] sm:$0xf]
  %v498 = vld [vmem:[%s3 + $0x1c] sm:$0xf]
  %v499 = vld [vmem:[%s3 + $0x20] sm:$0xf]
  %v500 = vld [vmem:[%s3 + $0x24] sm:$0xf]
  %v501 = vld [vmem:[%s3 + $0x28] sm:$0xf]
  %v502 = vld [vmem:[%s3 + $0x2c] sm:$0xf]
  %v503 = vld [vmem:[%s3 + $0x30] sm:$0xf]
  %v504 = vld [vmem:[%s3 + $0x34] sm:$0xf]
  %v505 = vld [vmem:[%s3 + $0x38] sm:$0xf]
  %v506 = vld [vmem:[%s3 + $0x3c] sm:$0xf]
  %v507 = vld [vmem:[%s4] sm:$0x1]
  %v509 = vlaneseq
  %v510 = vshrl.u32 %v509, 7
  %v511 = vsub.s32 0, %v510
  %v512 = vrot.slane %v507, %v511
  %v530 = vunpack.c.l.b16 %v491
  %v531 = vunpack.c.l.b16 %v492
  %v532 = vunpack.c.l.b16 %v493
  %v533 = vunpack.c.l.b16 %v494
  %v534 = vunpack.c.l.b16 %v495
  %v535 = vunpack.c.l.b16 %v496
  %v536 = vunpack.c.l.b16 %v497
  %v537 = vunpack.c.l.b16 %v498
  %v538 = vunpack.c.l.b16 %v499
  %v539 = vunpack.c.l.b16 %v500
  %v540 = vunpack.c.l.b16 %v501
  %v541 = vunpack.c.l.b16 %v502
  %v542 = vunpack.c.l.b16 %v503
  %v543 = vunpack.c.l.b16 %v504
  %v544 = vunpack.c.l.b16 %v505
  %v545 = vunpack.c.l.b16 %v506
  %v546 = vpack.c.b16 %v531, %v530
  %v547 = vpack.c.b16 %v533, %v532
  %v548 = vpack.c.b16 %v535, %v534
  %v549 = vpack.c.b16 %v537, %v536
  %v550 = vpack.c.b16 %v539, %v538
  %v551 = vpack.c.b16 %v541, %v540
  %v552 = vpack.c.b16 %v543, %v542
  %v553 = vpack.c.b16 %v545, %v544
  %562 = vmatprep.subr.bf16.mxu0 0
  %563 = vmatpush1.bf16.msra.mxu0 %v546
  %564 = vmatprep.subr.bf16.mxu0 0
  %565 = vmatpush1.bf16.msra.mxu0 %v547
  %566 = vmatprep.subr.bf16.mxu0 0
  %567 = vmatpush1.bf16.msra.mxu0 %v548
  %568 = vmatprep.subr.bf16.mxu0 0
  %569 = vmatpush1.bf16.msra.mxu0 %v549
  %570 = vmatprep.subr.bf16.mxu0 0
  %571 = vmatpush1.bf16.msra.mxu0 %v550
  %572 = vmatprep.subr.bf16.mxu0 0
  %573 = vmatpush1.bf16.msra.mxu0 %v551
  %574 = vmatprep.subr.bf16.mxu0 0
  %575 = vmatpush1.bf16.msra.mxu0 %v552
  %576 = vmatprep.subr.bf16.mxu0 0
  %577 = vmatpush1.bf16.msra.mxu0 %v553
  %578 = vmatprep.subr.bf16.mxu0 0
  %579 = vmatpush1.bf16.msra.mxu0 0
  %580 = vmatprep.subr.bf16.mxu0 0
  %581 = vmatpush1.bf16.msra.mxu0 0
  %582 = vmatprep.subr.bf16.mxu0 0
  %583 = vmatpush1.bf16.msra.mxu0 0
  %584 = vmatprep.subr.bf16.mxu0 0
  %585 = vmatpush1.bf16.msra.mxu0 0
  %586 = vmatprep.subr.bf16.mxu0 0
  %587 = vmatpush1.bf16.msra.mxu0 0
  %588 = vmatprep.subr.bf16.mxu0 0
  %589 = vmatpush1.bf16.msra.mxu0 0
  %590 = vmatprep.subr.bf16.mxu0 0
  %591 = vmatpush1.bf16.msra.mxu0 0
  %592 = vmatprep.subr.bf16.mxu0 0
  %593 = vmatpush1.bf16.msra.mxu0 0
  %594 = vmatprep.mubr.bf16.mxu0 0
  %595 = vmatmul.mubr.bf16.gmra.mrb[0].mxu0 %v483
  %v596 = vpop.f32.mrb[0].mxu0
  %v597 = vadd.f32 %v512, %v596
  %v598 = vpop.f32.mrb[0].mxu0
  %v599 = vpop.f32.mrb[0].mxu0
  %v600 = vadd.f32 %v512, %v599
  %v601 = vpop.f32.mrb[0].mxu0
  %602 = vmatprep.mubr.bf16.mxu0 0
  %603 = vmatmul.mubr.bf16.gmra.mrb[0].mxu0 %v484
  %v604 = vpop.f32.mrb[0].mxu0
  %v605 = vadd.f32 %v512, %v604
  %v606 = vpop.f32.mrb[0].mxu0
  %v607 = vpop.f32.mrb[0].mxu0
  %v608 = vadd.f32 %v512, %v607
  %v609 = vpop.f32.mrb[0].mxu0
  %610 = vmatprep.mubr.bf16.mxu0 0
  %611 = vmatmul.mubr.bf16.gmra.mrb[0].mxu0 %v485
  %v612 = vpop.f32.mrb[0].mxu0
  %v613 = vadd.f32 %v512, %v612
  %v614 = vpop.f32.mrb[0].mxu0
  %v615 = vpop.f32.mrb[0].mxu0
  %v616 = vadd.f32 %v512, %v615
  %v617 = vpop.f32.mrb[0].mxu0
  %618 = vmatprep.mubr.bf16.mxu0 0
  %619 = vmatmul.mubr.bf16.gmra.mrb[0].mxu0 %v486
  %v620 = vpop.f32.mrb[0].mxu0
  %v621 = vadd.f32 %v512, %v620
  %v622 = vpop.f32.mrb[0].mxu0
  %v623 = vpop.f32.mrb[0].mxu0
  %v624 = vadd.f32 %v512, %v623
  %v625 = vpop.f32.mrb[0].mxu0
  %626 = vmatprep.mubr.bf16.mxu0 0
  %627 = vmatmul.mubr.bf16.gmra.mrb[0].mxu0 %v487
  %v628 = vpop.f32.mrb[0].mxu0
  %v629 = vadd.f32 %v512, %v628
  %v630 = vpop.f32.mrb[0].mxu0
  %v631 = vpop.f32.mrb[0].mxu0
  %v632 = vadd.f32 %v512, %v631
  %v633 = vpop.f32.mrb[0].mxu0
  %634 = vmatprep.mubr.bf16.mxu0 0
  %635 = vmatmul.mubr.bf16.gmra.mrb[0].mxu0 %v488
  %v636 = vpop.f32.mrb[0].mxu0
  %v637 = vadd.f32 %v512, %v636
  %v638 = vpop.f32.mrb[0].mxu0
  %v639 = vpop.f32.mrb[0].mxu0
  %v640 = vadd.f32 %v512, %v639
  %v641 = vpop.f32.mrb[0].mxu0
  %642 = vmatprep.mubr.bf16.mxu0 0
  %643 = vmatmul.mubr.bf16.gmra.mrb[0].mxu0 %v489
  %v644 = vpop.f32.mrb[0].mxu0
  %v645 = vadd.f32 %v512, %v644
  %v646 = vpop.f32.mrb[0].mxu0
  %v647 = vpop.f32.mrb[0].mxu0
  %v648 = vadd.f32 %v512, %v647
  %v649 = vpop.f32.mrb[0].mxu0
  %650 = vmatprep.mubr.bf16.mxu0 0
  %651 = vmatmul.mubr.bf16.gmra.mrb[0].mxu0 %v490
  %v652 = vpop.f32.mrb[0].mxu0
  %v653 = vadd.f32 %v512, %v652
  %v654 = vpop.f32.mrb[0].mxu0
  %v655 = vpop.f32.mrb[0].mxu0
  %v656 = vadd.f32 %v512, %v655
  %v657 = vpop.f32.mrb[0].mxu0
  %658 = vdwg.mxu0
  %v659 = vmax.f32 %v597, 0.0
  %v660 = vmax.f32 %v600, 0.0
  %v661 = vmax.f32 %v605, 0.0
  %v662 = vmax.f32 %v608, 0.0
  %v663 = vmax.f32 %v613, 0.0
  %v664 = vmax.f32 %v616, 0.0
  %v665 = vmax.f32 %v621, 0.0
  %v666 = vmax.f32 %v624, 0.0
  %v667 = vmax.f32 %v629, 0.0
  %v668 = vmax.f32 %v632, 0.0
  %v669 = vmax.f32 %v637, 0.0
  %v670 = vmax.f32 %v640, 0.0
  %v671 = vmax.f32 %v645, 0.0
  %v672 = vmax.f32 %v648, 0.0
  %v673 = vmax.f32 %v653, 0.0
  %v674 = vmax.f32 %v656, 0.0
  %v675 = vpack.c.bf16 %v660, %v659
  %v676 = vpack.c.bf16 %v662, %v661
  %v677 = vpack.c.bf16 %v664, %v663
  %v678 = vpack.c.bf16 %v666, %v665
  %v679 = vpack.c.bf16 %v668, %v667
  %v680 = vpack.c.bf16 %v670, %v669
  %v681 = vpack.c.bf16 %v672, %v671
  %v682 = vpack.c.bf16 %v674, %v673
  %v683 = vld [vmem:[%s5] sm:$0xf]
  %v684 = vld [vmem:[%s5 + $0x4] sm:$0xf]
  %v685 = vld [vmem:[%s5 + $0x8] sm:$0xf]
  %v686 = vld [vmem:[%s5 + $0xc] sm:$0xf]
  %v687 = vld [vmem:[%s5 + $0x10] sm:$0xf]
  %v688 = vld [vmem:[%s5 + $0x14] sm:$0xf]
  %v689 = vld [vmem:[%s5 + $0x18] sm:$0xf]
  %v690 = vld [vmem:[%s5 + $0x1c] sm:$0xf]
  %v691 = vld [vmem:[%s5 + $0x20] sm:$0xf]
  %v692 = vld [vmem:[%s5 + $0x24] sm:$0xf]
  %v693 = vld [vmem:[%s5 + $0x28] sm:$0xf]
  %v694 = vld [vmem:[%s5 + $0x2c] sm:$0xf]
  %v695 = vld [vmem:[%s5 + $0x30] sm:$0xf]
  %v696 = vld [vmem:[%s5 + $0x34] sm:$0xf]
  %v697 = vld [vmem:[%s5 + $0x38] sm:$0xf]
  %v698 = vld [vmem:[%s5 + $0x3c] sm:$0xf]
  %v699 = vld [vmem:[%s6] sm:$0x1]
  %v701 = vlaneseq
  %v702 = vshrl.u32 %v701, 7
  %v703 = vsub.s32 0, %v702
  %v704 = vrot.slane %v699, %v703
  %v722 = vunpack.c.l.b16 %v683
  %v723 = vunpack.c.l.b16 %v684
  %v724 = vunpack.c.l.b16 %v685
  %v725 = vunpack.c.l.b16 %v686
  %v726 = vunpack.c.l.b16 %v687
  %v727 = vunpack.c.l.b16 %v688
  %v728 = vunpack.c.l.b16 %v689
  %v729 = vunpack.c.l.b16 %v690
  %v730 = vunpack.c.l.b16 %v691
  %v731 = vunpack.c.l.b16 %v692
  %v732 = vunpack.c.l.b16 %v693
  %v733 = vunpack.c.l.b16 %v694
  %v734 = vunpack.c.l.b16 %v695
  %v735 = vunpack.c.l.b16 %v696
  %v736 = vunpack.c.l.b16 %v697
  %v737 = vunpack.c.l.b16 %v698
  %v738 = vpack.c.b16 %v723, %v722
  %v739 = vpack.c.b16 %v725, %v724
  %v740 = vpack.c.b16 %v727, %v726
  %v741 = vpack.c.b16 %v729, %v728
  %v742 = vpack.c.b16 %v731, %v730
  %v743 = vpack.c.b16 %v733, %v732
  %v744 = vpack.c.b16 %v735, %v734
  %v745 = vpack.c.b16 %v737, %v736
  %754 = vmatprep.subr.bf16.mxu0 0
  %755 = vmatpush1.bf16.msra.mxu0 %v738
  %756 = vmatprep.subr.bf16.mxu0 0
  %757 = vmatpush1.bf16.msra.mxu0 %v739
  %758 = vmatprep.subr.bf16.mxu0 0
  %759 = vmatpush1.bf16.msra.mxu0 %v740
  %760 = vmatprep.subr.bf16.mxu0 0
  %761 = vmatpush1.bf16.msra.mxu0 %v741
  %762 = vmatprep.subr.bf16.mxu0 0
  %763 = vmatpush1.bf16.msra.mxu0 %v742
  %764 = vmatprep.subr.bf16.mxu0 0
  %765 = vmatpush1.bf16.msra.mxu0 %v743
  %766 = vmatprep.subr.bf16.mxu0 0
  %767 = vmatpush1.bf16.msra.mxu0 %v744
  %768 = vmatprep.subr.bf16.mxu0 0
  %769 = vmatpush1.bf16.msra.mxu0 %v745
  %770 = vmatprep.subr.bf16.mxu0 0
  %771 = vmatpush1.bf16.msra.mxu0 0
  %772 = vmatprep.subr.bf16.mxu0 0
  %773 = vmatpush1.bf16.msra.mxu0 0
  %774 = vmatprep.subr.bf16.mxu0 0
  %775 = vmatpush1.bf16.msra.mxu0 0
  %776 = vmatprep.subr.bf16.mxu0 0
  %777 = vmatpush1.bf16.msra.mxu0 0
  %778 = vmatprep.subr.bf16.mxu0 0
  %779 = vmatpush1.bf16.msra.mxu0 0
  %780 = vmatprep.subr.bf16.mxu0 0
  %781 = vmatpush1.bf16.msra.mxu0 0
  %782 = vmatprep.subr.bf16.mxu0 0
  %783 = vmatpush1.bf16.msra.mxu0 0
  %784 = vmatprep.subr.bf16.mxu0 0
  %785 = vmatpush1.bf16.msra.mxu0 0
  %786 = vmatprep.mubr.bf16.mxu0 0
  %787 = vmatmul.mubr.bf16.gmra.mrb[0].mxu0 %v675
  %v788 = vpop.f32.mrb[0].mxu0
  %v789 = vadd.f32 %v704, %v788
  %v790 = vpop.f32.mrb[0].mxu0
  %v791 = vpop.f32.mrb[0].mxu0
  %v792 = vadd.f32 %v704, %v791
  %v793 = vpop.f32.mrb[0].mxu0
  %794 = vmatprep.mubr.bf16.mxu0 0
  %795 = vmatmul.mubr.bf16.gmra.mrb[0].mxu0 %v676
  %v796 = vpop.f32.mrb[0].mxu0
  %v797 = vadd.f32 %v704, %v796
  %v798 = vpop.f32.mrb[0].mxu0
  %v799 = vpop.f32.mrb[0].mxu0
  %v800 = vadd.f32 %v704, %v799
  %v801 = vpop.f32.mrb[0].mxu0
  %802 = vmatprep.mubr.bf16.mxu0 0
  %803 = vmatmul.mubr.bf16.gmra.mrb[0].mxu0 %v677
  %v804 = vpop.f32.mrb[0].mxu0
  %v805 = vadd.f32 %v704, %v804
  %v806 = vpop.f32.mrb[0].mxu0
  %v807 = vpop.f32.mrb[0].mxu0
  %v808 = vadd.f32 %v704, %v807
  %v809 = vpop.f32.mrb[0].mxu0
  %810 = vmatprep.mubr.bf16.mxu0 0
  %811 = vmatmul.mubr.bf16.gmra.mrb[0].mxu0 %v678
  %v812 = vpop.f32.mrb[0].mxu0
  %v813 = vadd.f32 %v704, %v812
  %v814 = vpop.f32.mrb[0].mxu0
  %v815 = vpop.f32.mrb[0].mxu0
  %v816 = vadd.f32 %v704, %v815
  %v817 = vpop.f32.mrb[0].mxu0
  %818 = vmatprep.mubr.bf16.mxu0 0
  %819 = vmatmul.mubr.bf16.gmra.mrb[0].mxu0 %v679
  %v820 = vpop.f32.mrb[0].mxu0
  %v821 = vadd.f32 %v704, %v820
  %v822 = vpop.f32.mrb[0].mxu0
  %v823 = vpop.f32.mrb[0].mxu0
  %v824 = vadd.f32 %v704, %v823
  %v825 = vpop.f32.mrb[0].mxu0
  %826 = vmatprep.mubr.bf16.mxu0 0
  %827 = vmatmul.mubr.bf16.gmra.mrb[0].mxu0 %v680
  %v828 = vpop.f32.mrb[0].mxu0
  %v829 = vadd.f32 %v704, %v828
  %v830 = vpop.f32.mrb[0].mxu0
  %v831 = vpop.f32.mrb[0].mxu0
  %v832 = vadd.f32 %v704, %v831
  %v833 = vpop.f32.mrb[0].mxu0
  %834 = vmatprep.mubr.bf16.mxu0 0
  %835 = vmatmul.mubr.bf16.gmra.mrb[0].mxu0 %v681
  %v836 = vpop.f32.mrb[0].mxu0
  %v837 = vadd.f32 %v704, %v836
  %v838 = vpop.f32.mrb[0].mxu0
  %v839 = vpop.f32.mrb[0].mxu0
  %v840 = vadd.f32 %v704, %v839
  %v841 = vpop.f32.mrb[0].mxu0
  %842 = vmatprep.mubr.bf16.mxu0 0
  %843 = vmatmul.mubr.bf16.gmra.mrb[0].mxu0 %v682
  %v844 = vpop.f32.mrb[0].mxu0
  %v845 = vadd.f32 %v704, %v844
  %v846 = vpop.f32.mrb[0].mxu0
  %v847 = vpop.f32.mrb[0].mxu0
  %v848 = vadd.f32 %v704, %v847
  %v849 = vpop.f32.mrb[0].mxu0
  %850 = vdwg.mxu0
  %851 = vst [vmem:[%s7] sm:$0xff] %v789
  %852 = vst [vmem:[%s7 + $0x8] sm:$0xff] %v792
  %853 = vst [vmem:[%s7 + $0x10] sm:$0xff] %v797
  %854 = vst [vmem:[%s7 + $0x18] sm:$0xff] %v800
  %855 = vst [vmem:[%s7 + $0x20] sm:$0xff] %v805
  %856 = vst [vmem:[%s7 + $0x28] sm:$0xff] %v808
  %857 = vst [vmem:[%s7 + $0x30] sm:$0xff] %v813
  %858 = vst [vmem:[%s7 + $0x38] sm:$0xff] %v816
  %859 = vst [vmem:[%s7 + $0x40] sm:$0xff] %v821
  %860 = vst [vmem:[%s7 + $0x48] sm:$0xff] %v824
  %861 = vst [vmem:[%s7 + $0x50] sm:$0xff] %v829
  %862 = vst [vmem:[%s7 + $0x58] sm:$0xff] %v832
  %863 = vst [vmem:[%s7 + $0x60] sm:$0xff] %v837
  %864 = vst [vmem:[%s7 + $0x68] sm:$0xff] %v840
  %865 = vst [vmem:[%s7 + $0x70] sm:$0xff] %v845
  %866 = vst [vmem:[%s7 + $0x78] sm:$0xff] %v848
  // Predicated region
  $region30: #{qnet_forward.1} parent=0 // pred_check
    _
  $region31: #{qnet_forward.1} parent=0 // pred_check_branch
    %868 = sbr.rel (0) target = $region33
  $region32: #{qnet_forward.1} parent=0 // pred_region
    _
  $region33: #{qnet_forward.1} parent=0 // pred_fallthru
    _
  // Predicated region
  $region34: #{qnet_forward.1} parent=0 // pred_check
    _
  $region35: #{qnet_forward.1} parent=0 // pred_check_branch
    %870 = sbr.rel (0) target = $region37
  $region36: #{qnet_forward.1} parent=0 // pred_region
    _
  $region37: #{qnet_forward.1} parent=0 // pred_fallthru
    _

</llo_original>
